<compile_context>
chip_gen: v5e
topology: v5e:2x2
jax: 0.10.0
libtpu: 0.0.40
codegen_flags: <defaults>
</compile_context>

<pallas_src>
import functools

import jax
import jax.numpy as jnp
from jax.experimental import pallas as pl
from jax.experimental.pallas import tpu as pltpu


def _actor_kernel(max_action, T,
                  x_ref,                               # [bb, T*obs] (row b = x[b].reshape(-1))
                  wih_f_ref, whh_f_ref, b_f_ref,       # [obs,4H], [H,4H] f32, [1,4H] f32
                  wih_b_ref, b_b_ref,                  # [obs,4H], [1,4H]  (backward dir, h0=0)
                  wfc_f_ref, wfc_b_ref, bfc_ref,       # LSTM.fc split fwd/bwd halves
                  w1_ref, b1_ref, w2_ref, b2_ref, w3_ref, b3_ref,   # Actor MLP
                  out_ref):
    obs = x_ref.shape[1] // T
    H = whh_f_ref.shape[0]
    f32 = jnp.float32
    cdtype = wih_f_ref.dtype           # non-recurrent matmul input dtype (f32 or bf16)

    x2d = x_ref[...]
    wih = wih_f_ref[...]               # hoisted: read weights / biases once
    whh = whh_f_ref[...]               # recurrent weight stays f32 on every chip
    b_f = b_f_ref[...]

    # Lane-constant scale / mask so all four gate activations are one EUP tanh pass
    # over the full [bb, 4H] block (torch gate order i, f, g, o):
    #   i/f/o lanes: sigmoid(z) = 0.5*tanh(0.5*z) + 0.5 ; g lanes: tanh(z).
    lane = jax.lax.broadcasted_iota(jnp.int32, (1, 4 * H), 1)
    g_mask = (lane >= 2 * H) & (lane < 3 * H)
    g_scale = jnp.where(g_mask, 1.0, 0.5)

    def gates(z):                      # z: [bb, 4H] f32
        t = jnp.tanh(z * g_scale)      # single EUP pass for all gates
        a = jnp.where(g_mask, t, 0.5 * t + 0.5)
        # Static lane slices (offsets H/2H/3H); the resulting rolls go to the XLU,
        # off the EUP/VALU slots.
        return a[:, 0:H], a[:, H:2 * H], a[:, 2 * H:3 * H], a[:, 3 * H:4 * H]

    def xz(t):                         # x_t @ W_ih + b : no h dependence -> off the chain
        x_t = x2d[:, t * obs:(t + 1) * obs]
        return jnp.dot(x_t, wih, preferred_element_type=f32) + b_f

    # ---- forward direction.  t=0 has h=c=0, so the recurrent matmul vanishes. ----
    i, _f, g, o = gates(xz(0))
    c = i * g
    h = o * jnp.tanh(c)
    # T is small & static -> full unroll; switch to lax.fori_loop(unroll=k) if T grows.
    for t in range(1, T):
        z = xz(t) + jnp.dot(h, whh, preferred_element_type=f32)   # recurrence stays f32
        i, f, g, o = gates(z)
        c = f * c + i * g
        h = o * jnp.tanh(c)

    # ---- backward direction: r_out[:, -1, H:] is the backward cell after ONE step
    #      on x[:, T-1] from a zero state, so the W_hh / f*c terms vanish. ----
    x_last = x2d[:, (T - 1) * obs:T * obs]
    z_b = jnp.dot(x_last, wih_b_ref[...], preferred_element_type=f32) + b_b_ref[...]
    i_b, _fb, g_b, o_b = gates(z_b)
    h_b = o_b * jnp.tanh(i_b * g_b)

    # ---- LSTM.fc on concat(h, h_b): two matmuls, avoids a lane concat ----
    s = (jnp.dot(h.astype(cdtype), wfc_f_ref[...], preferred_element_type=f32)
         + jnp.dot(h_b.astype(cdtype), wfc_b_ref[...], preferred_element_type=f32)
         + bfc_ref[...])

    # ---- Actor MLP head ----
    x1 = jnp.maximum(
        jnp.dot(s.astype(cdtype), w1_ref[...], preferred_element_type=f32) + b1_ref[...], 0.0)
    x2 = jnp.maximum(
        jnp.dot(x1.astype(cdtype), w2_ref[...], preferred_element_type=f32) + b2_ref[...], 0.0)
    a = max_action * jnp.tanh(
        jnp.dot(x2.astype(cdtype), w3_ref[...], preferred_element_type=f32) + b3_ref[...])
    # action_dim < 128 -> masked store; negligible at these sizes.  Pack actions
    # lane-dense at the wrapper only if this head is replicated over huge batches.
    out_ref[...] = a.astype(out_ref.dtype)


def _pick_batch_block(B, cap=2048):
    """Largest multiple-of-8 divisor of B that is <= cap and leaves >= 2 blocks
    whenever B >= 16 (so v7x's two TensorCores both get work).  Falls back to the
    whole batch when B is small or not sublane aligned.  cap=2048 keeps the
    per-block working set (double-buffered x block + per-step [bb,4H] temporaries)
    far below even v7x's 64 MiB VMEM at these model dims; lower the cap if obs/H/T
    grow substantially."""
    if B <= 8 or B % 8 != 0:
        return B
    target = max(8, min(cap, B // 2))
    bb = 8
    for d in range(8, target + 1, 8):
        if B % d == 0:
            bb = d
    return bb


def actor_forward(x, params, *, max_action=1.0, compute_dtype=None, batch_block=None):
    """x: [B, T, obs_dim] float32. Returns [B, action_dim] float32."""
    B, T, obs_dim = x.shape
    action_dim = params["w3"].shape[-1]

    bb = batch_block if batch_block is not None else _pick_batch_block(B)
    if B % bb != 0 or (bb != B and bb % 8 != 0):
        bb = B
    nb = B // bb

    # bf16 matmul inputs only pay once the batch block is big enough to fill packed
    # vregs / MXU rows; the recurrent matmul always stays f32 (see kernel).  Default
    # is f32 end-to-end, which is also the right choice on v5e.
    cd = jnp.float32
    if compute_dtype is not None and compute_dtype != jnp.float32 and bb >= 256:
        cd = compute_dtype

    # Free row-major reshape (no HBM rewrite, unlike a transpose): x2d[b, t*obs + o].
    x2d = x.reshape(B, T * obs_dim).astype(cd)

    def w(name):     # non-recurrent matmul inputs in compute dtype
        return params[name].astype(cd)

    def f32p(name):  # recurrent weight + all biases stay f32
        return params[name].astype(jnp.float32)

    args = (x2d,
            w("wih_f"), f32p("whh_f"), f32p("b_f"),
            w("wih_b"), f32p("b_b"),
            w("wfc_f"), w("wfc_b"), f32p("bfc"),
            w("w1"), f32p("b1"), w("w2"), f32p("b2"), w("w3"), f32p("b3"))

    def rep_spec(a):  # full-array block, same block for every grid step
        return pl.BlockSpec(a.shape, lambda i, _nd=a.ndim: (0,) * _nd)

    in_specs = [pl.BlockSpec((bb, T * obs_dim), lambda i: (i, 0))]
    in_specs += [rep_spec(a) for a in args[1:]]
    out_specs = pl.BlockSpec((bb, action_dim), lambda i: (i, 0))

    kernel = functools.partial(_actor_kernel, float(max_action), T)
    return pl.pallas_call(
        kernel,
        out_shape=jax.ShapeDtypeStruct((B, action_dim), jnp.float32),
        grid=(nb,),
        in_specs=in_specs,
        out_specs=out_specs,
        compiler_params=pltpu.CompilerParams(
            # On v7x the two TensorCores split this axis ("parallel"); on v5e/v6e the
            # grid is a sequential loop, so large batch blocks keep nb (and per-step
            # overhead) small.  Try pltpu.CORE_PARALLEL if profiling ever shows only
            # one v7x core active.
            dimension_semantics=("parallel",)),
    )(*args)


# ------------------------- parameter init (deterministic) -------------------------
def init_params(key, obs_dim, state_dim, hidden_dim, action_dim):
    H = state_dim  # rnn_dim == out_dim == state_dim in the LSTM module
    keys = jax.random.split(key, 16)

    def rnd(k, shape, scale=0.1):
        return scale * jax.random.normal(k, shape, jnp.float32)

    return {
        # LSTM gate weights fused along lanes in torch order (i, f, g, o),
        # pre-transposed to [in, 4H]; b = b_ih + b_hh folded together.
        "wih_f": rnd(keys[0], (obs_dim, 4 * H)),
        "whh_f": rnd(keys[1], (H, 4 * H)),
        "b_f":   rnd(keys[2], (1, 4 * H)),
        "wih_b": rnd(keys[3], (obs_dim, 4 * H)),
        "whh_b": rnd(keys[4], (H, 4 * H)),        # used only by the pure-JAX reference
        "b_b":   rnd(keys[5], (1, 4 * H)),
        # LSTM.fc : Linear(2H -> state_dim), split into fwd/bwd halves
        "wfc_f": rnd(keys[6], (H, state_dim)),
        "wfc_b": rnd(keys[7], (H, state_dim)),
        "bfc":   rnd(keys[8], (1, state_dim)),
        # Actor MLP
        "w1": rnd(keys[9],  (state_dim, hidden_dim[0])),
        "b1": rnd(keys[10], (1, hidden_dim[0])),
        "w2": rnd(keys[11], (hidden_dim[0], hidden_dim[1])),
        "b2": rnd(keys[12], (1, hidden_dim[1])),
        "w3": rnd(keys[13], (hidden_dim[1], action_dim)),
        "b3": rnd(keys[14], (1, action_dim)),
    }


# ------------------------- pure-JAX reference (full bi-LSTM) -------------------------
def _cell_ref(x_t, h, c, wih, whh, b):
    H = whh.shape[0]
    z = x_t @ wih + h @ whh + b
    i = jax.nn.sigmoid(z[:, 0 * H:1 * H])
    f = jax.nn.sigmoid(z[:, 1 * H:2 * H])
    g = jnp.tanh(z[:, 2 * H:3 * H])
    o = jax.nn.sigmoid(z[:, 3 * H:4 * H])
    c = f * c + i * g
    h = o * jnp.tanh(c)
    return h, c


def actor_reference(x, p, max_action=1.0):
    B, T, _ = x.shape
    H = p["whh_f"].shape[0]
    h = jnp.zeros((B, H), jnp.float32)
    c = jnp.zeros((B, H), jnp.float32)
    for t in range(T):
        h, c = _cell_ref(x[:, t], h, c, p["wih_f"], p["whh_f"], p["b_f"])
    hb = jnp.zeros((B, H), jnp.float32)
    cb = jnp.zeros((B, H), jnp.float32)
    hb_last = None
    for t in reversed(range(T)):
        hb, cb = _cell_ref(x[:, t], hb, cb, p["wih_b"], p["whh_b"], p["b_b"])
        if t == T - 1:
            hb_last = hb
    s = h @ p["wfc_f"] + hb_last @ p["wfc_b"] + p["bfc"]
    x1 = jnp.maximum(s @ p["w1"] + p["b1"], 0.0)
    x2 = jnp.maximum(x1 @ p["w2"] + p["b2"], 0.0)
    return max_action * jnp.tanh(x2 @ p["w3"] + p["b3"])


if __name__ == "__main__":
    key = jax.random.PRNGKey(0)
    T = 4
    obs_dim, state_dim = 8, 16
    hidden_dim = (32, 32)
    action_dim = 4
    max_action = 1.0

    params = init_params(key, obs_dim, state_dim, hidden_dim, action_dim)

    # Small batch -> single block (bb = B = 2), grid=(1,), f32 end-to-end.
    B = 2
    x = jax.random.normal(jax.random.fold_in(key, 123), (B, T, obs_dim), jnp.float32)
    out = jax.block_until_ready(actor_forward(x, params, max_action=max_action))
    ref = actor_reference(x, params, max_action)
    assert out.shape == (B, action_dim), out.shape
    assert jnp.allclose(out, ref, atol=1e-5, rtol=1e-5), (out, ref)

    # B=16 -> bb=8, nb=2: two blocks so a v7x chip can use both TensorCores.
    B2 = 16
    x2 = jax.random.normal(jax.random.fold_in(key, 321), (B2, T, obs_dim), jnp.float32)
    out2 = jax.block_until_ready(actor_forward(x2, params, max_action=max_action))
    ref2 = actor_reference(x2, params, max_action)
    assert out2.shape == (B2, action_dim), out2.shape
    assert jnp.allclose(out2, ref2, atol=1e-5, rtol=1e-5), (out2, ref2)

    # Large batch -> big blocks (bb=256, nb=2); bf16 inputs for the non-recurrent
    # matmuls (recurrence stays f32), looser tolerance.
    B3 = 512
    x3 = jax.random.normal(jax.random.fold_in(key, 777), (B3, T, obs_dim), jnp.float32)
    out3 = jax.block_until_ready(
        actor_forward(x3, params, max_action=max_action, compute_dtype=jnp.bfloat16))
    ref3 = actor_reference(x3, params, max_action)
    assert out3.shape == (B3, action_dim), out3.shape
    assert jnp.allclose(out3, ref3, atol=5e-2, rtol=5e-2), (out3, ref3)

    print("KERNEL_OK")
</pallas_src>

<mosaic_0001>
module attributes {stable_mosaic.version = 11 : i64} {
  func.func @_actor_kernel(%arg0: i32, %arg1: memref<2x32xf32, #tpu.memory_space<vmem>>, %arg2: memref<8x64xf32, #tpu.memory_space<vmem>>, %arg3: memref<16x64xf32, #tpu.memory_space<vmem>>, %arg4: memref<1x64xf32, #tpu.memory_space<vmem>>, %arg5: memref<8x64xf32, #tpu.memory_space<vmem>>, %arg6: memref<1x64xf32, #tpu.memory_space<vmem>>, %arg7: memref<16x16xf32, #tpu.memory_space<vmem>>, %arg8: memref<16x16xf32, #tpu.memory_space<vmem>>, %arg9: memref<1x16xf32, #tpu.memory_space<vmem>>, %arg10: memref<16x32xf32, #tpu.memory_space<vmem>>, %arg11: memref<1x32xf32, #tpu.memory_space<vmem>>, %arg12: memref<32x32xf32, #tpu.memory_space<vmem>>, %arg13: memref<1x32xf32, #tpu.memory_space<vmem>>, %arg14: memref<32x4xf32, #tpu.memory_space<vmem>>, %arg15: memref<1x4xf32, #tpu.memory_space<vmem>>, %arg16: memref<2x4xf32, #tpu.memory_space<vmem>>) attributes {dimension_semantics = [#tpu.dimension_semantics<parallel>], iteration_bounds = array<i64: 1>, scalar_prefetch = 0 : i64, scratch_operands = 0 : i64, tpu.core_type = #tpu.core_type<tc>, window_params = [{transform_indices = @transform_0, window_bounds = array<i64: 2, 32>}, {pipeline_mode = #tpu.pipeline_mode<synchronous>, transform_indices = @transform_1, window_bounds = array<i64: 8, 64>}, {pipeline_mode = #tpu.pipeline_mode<synchronous>, transform_indices = @transform_2, window_bounds = array<i64: 16, 64>}, {pipeline_mode = #tpu.pipeline_mode<synchronous>, transform_indices = @transform_3, window_bounds = array<i64: 1, 64>}, {pipeline_mode = #tpu.pipeline_mode<synchronous>, transform_indices = @transform_4, window_bounds = array<i64: 8, 64>}, {pipeline_mode = #tpu.pipeline_mode<synchronous>, transform_indices = @transform_5, window_bounds = array<i64: 1, 64>}, {pipeline_mode = #tpu.pipeline_mode<synchronous>, transform_indices = @transform_6, window_bounds = array<i64: 16, 16>}, {pipeline_mode = #tpu.pipeline_mode<synchronous>, transform_indices = @transform_7, window_bounds = array<i64: 16, 16>}, {pipeline_mode = #tpu.pipeline_mode<synchronous>, transform_indices = @transform_8, window_bounds = array<i64: 1, 16>}, {pipeline_mode = #tpu.pipeline_mode<synchronous>, transform_indices = @transform_9, window_bounds = array<i64: 16, 32>}, {pipeline_mode = #tpu.pipeline_mode<synchronous>, transform_indices = @transform_10, window_bounds = array<i64: 1, 32>}, {pipeline_mode = #tpu.pipeline_mode<synchronous>, transform_indices = @transform_11, window_bounds = array<i64: 32, 32>}, {pipeline_mode = #tpu.pipeline_mode<synchronous>, transform_indices = @transform_12, window_bounds = array<i64: 1, 32>}, {pipeline_mode = #tpu.pipeline_mode<synchronous>, transform_indices = @transform_13, window_bounds = array<i64: 32, 4>}, {pipeline_mode = #tpu.pipeline_mode<synchronous>, transform_indices = @transform_14, window_bounds = array<i64: 1, 4>}, {transform_indices = @transform_15, window_bounds = array<i64: 2, 4>}]} {
    %c0 = arith.constant 0 : index
    %c0_0 = arith.constant 0 : index
    %0 = vector.load %arg1[%c0, %c0_0] : memref<2x32xf32, #tpu.memory_space<vmem>>, vector<2x32xf32>
    %c0_1 = arith.constant 0 : index
    %c0_2 = arith.constant 0 : index
    %1 = vector.load %arg2[%c0_1, %c0_2] : memref<8x64xf32, #tpu.memory_space<vmem>>, vector<8x64xf32>
    %c0_3 = arith.constant 0 : index
    %c0_4 = arith.constant 0 : index
    %2 = vector.load %arg3[%c0_3, %c0_4] : memref<16x64xf32, #tpu.memory_space<vmem>>, vector<16x64xf32>
    %c0_5 = arith.constant 0 : index
    %c0_6 = arith.constant 0 : index
    %3 = vector.load %arg4[%c0_5, %c0_6] : memref<1x64xf32, #tpu.memory_space<vmem>>, vector<1x64xf32>
    %4 = tpu.iota {dimensions = array<i32: 1>} : vector<1x64xi32>
    %c32_i32 = arith.constant 32 : i32
    %5 = vector.broadcast %c32_i32 : i32 to vector<1x64xi32>
    %6 = arith.cmpi sge, %4, %5 : vector<1x64xi32>
    %c48_i32 = arith.constant 48 : i32
    %7 = vector.broadcast %c48_i32 : i32 to vector<1x64xi32>
    %8 = arith.cmpi slt, %4, %7 : vector<1x64xi32>
    %9 = arith.andi %6, %8 : vector<1x64xi1>
    %cst = arith.constant 1.000000e+00 : f32
    %cst_7 = arith.constant 5.000000e-01 : f32
    %10 = vector.broadcast %cst : f32 to vector<1x64xf32>
    %11 = vector.broadcast %cst_7 : f32 to vector<1x64xf32>
    %12 = arith.select %9, %10, %11 : vector<1x64xi1>, vector<1x64xf32>
    %13 = vector.extract_strided_slice %0 {offsets = [0, 0], sizes = [2, 8], strides = [1, 1]} : vector<2x32xf32> to vector<2x8xf32>
    %cst_8 = arith.constant dense<0.000000e+00> : vector<2x64xf32>
    %14 = tpu.matmul %13, %1, %cst_8 {dimension_numbers = #tpu.dot_dimension_numbers<[1], [0], [0], [1], [0, 0, 1, 1], [], []>} : vector<2x8xf32>, vector<8x64xf32>, vector<2x64xf32> -> vector<2x64xf32>
    %15 = vector.broadcast %3 : vector<1x64xf32> to vector<2x64xf32>
    %16 = arith.addf %14, %15 : vector<2x64xf32>
    %17 = vector.broadcast %12 : vector<1x64xf32> to vector<2x64xf32>
    %18 = arith.mulf %16, %17 : vector<2x64xf32>
    %19 = math.tanh %18 : vector<2x64xf32>
    %cst_9 = arith.constant 5.000000e-01 : f32
    %20 = vector.broadcast %cst_9 : f32 to vector<2x64xf32>
    %21 = arith.mulf %20, %19 : vector<2x64xf32>
    %cst_10 = arith.constant 5.000000e-01 : f32
    %22 = vector.broadcast %cst_10 : f32 to vector<2x64xf32>
    %23 = arith.addf %21, %22 : vector<2x64xf32>
    %24 = vector.shape_cast %9 : vector<1x64xi1> to vector<1x64xi1>
    %25 = vector.broadcast %24 : vector<1x64xi1> to vector<2x64xi1>
    %26 = arith.select %25, %19, %23 : vector<2x64xi1>, vector<2x64xf32>
    %27 = vector.extract_strided_slice %26 {offsets = [0, 0], sizes = [2, 16], strides = [1, 1]} : vector<2x64xf32> to vector<2x16xf32>
    %28 = vector.extract_strided_slice %26 {offsets = [0, 32], sizes = [2, 16], strides = [1, 1]} : vector<2x64xf32> to vector<2x16xf32>
    %29 = vector.extract_strided_slice %26 {offsets = [0, 48], sizes = [2, 16], strides = [1, 1]} : vector<2x64xf32> to vector<2x16xf32>
    %30 = arith.mulf %27, %28 : vector<2x16xf32>
    %31 = math.tanh %30 : vector<2x16xf32>
    %32 = arith.mulf %29, %31 : vector<2x16xf32>
    %33 = vector.extract_strided_slice %0 {offsets = [0, 8], sizes = [2, 8], strides = [1, 1]} : vector<2x32xf32> to vector<2x8xf32>
    %cst_11 = arith.constant dense<0.000000e+00> : vector<2x64xf32>
    %34 = tpu.matmul %33, %1, %cst_11 {dimension_numbers = #tpu.dot_dimension_numbers<[1], [0], [0], [1], [0, 0, 1, 1], [], []>} : vector<2x8xf32>, vector<8x64xf32>, vector<2x64xf32> -> vector<2x64xf32>
    %35 = vector.broadcast %3 : vector<1x64xf32> to vector<2x64xf32>
    %36 = arith.addf %34, %35 : vector<2x64xf32>
    %cst_12 = arith.constant dense<0.000000e+00> : vector<2x64xf32>
    %37 = tpu.matmul %32, %2, %cst_12 {dimension_numbers = #tpu.dot_dimension_numbers<[1], [0], [0], [1], [0, 0, 1, 1], [], []>} : vector<2x16xf32>, vector<16x64xf32>, vector<2x64xf32> -> vector<2x64xf32>
    %38 = arith.addf %36, %37 : vector<2x64xf32>
    %39 = vector.broadcast %12 : vector<1x64xf32> to vector<2x64xf32>
    %40 = arith.mulf %38, %39 : vector<2x64xf32>
    %41 = math.tanh %40 : vector<2x64xf32>
    %cst_13 = arith.constant 5.000000e-01 : f32
    %42 = vector.broadcast %cst_13 : f32 to vector<2x64xf32>
    %43 = arith.mulf %42, %41 : vector<2x64xf32>
    %cst_14 = arith.constant 5.000000e-01 : f32
    %44 = vector.broadcast %cst_14 : f32 to vector<2x64xf32>
    %45 = arith.addf %43, %44 : vector<2x64xf32>
    %46 = vector.shape_cast %9 : vector<1x64xi1> to vector<1x64xi1>
    %47 = vector.broadcast %46 : vector<1x64xi1> to vector<2x64xi1>
    %48 = arith.select %47, %41, %45 : vector<2x64xi1>, vector<2x64xf32>
    %49 = vector.extract_strided_slice %48 {offsets = [0, 0], sizes = [2, 16], strides = [1, 1]} : vector<2x64xf32> to vector<2x16xf32>
    %50 = vector.extract_strided_slice %48 {offsets = [0, 16], sizes = [2, 16], strides = [1, 1]} : vector<2x64xf32> to vector<2x16xf32>
    %51 = vector.extract_strided_slice %48 {offsets = [0, 32], sizes = [2, 16], strides = [1, 1]} : vector<2x64xf32> to vector<2x16xf32>
    %52 = vector.extract_strided_slice %48 {offsets = [0, 48], sizes = [2, 16], strides = [1, 1]} : vector<2x64xf32> to vector<2x16xf32>
    %53 = arith.mulf %50, %30 : vector<2x16xf32>
    %54 = arith.mulf %49, %51 : vector<2x16xf32>
    %55 = arith.addf %53, %54 : vector<2x16xf32>
    %56 = math.tanh %55 : vector<2x16xf32>
    %57 = arith.mulf %52, %56 : vector<2x16xf32>
    %58 = vector.extract_strided_slice %0 {offsets = [0, 16], sizes = [2, 8], strides = [1, 1]} : vector<2x32xf32> to vector<2x8xf32>
    %cst_15 = arith.constant dense<0.000000e+00> : vector<2x64xf32>
    %59 = tpu.matmul %58, %1, %cst_15 {dimension_numbers = #tpu.dot_dimension_numbers<[1], [0], [0], [1], [0, 0, 1, 1], [], []>} : vector<2x8xf32>, vector<8x64xf32>, vector<2x64xf32> -> vector<2x64xf32>
    %60 = vector.broadcast %3 : vector<1x64xf32> to vector<2x64xf32>
    %61 = arith.addf %59, %60 : vector<2x64xf32>
    %cst_16 = arith.constant dense<0.000000e+00> : vector<2x64xf32>
    %62 = tpu.matmul %57, %2, %cst_16 {dimension_numbers = #tpu.dot_dimension_numbers<[1], [0], [0], [1], [0, 0, 1, 1], [], []>} : vector<2x16xf32>, vector<16x64xf32>, vector<2x64xf32> -> vector<2x64xf32>
    %63 = arith.addf %61, %62 : vector<2x64xf32>
    %64 = vector.broadcast %12 : vector<1x64xf32> to vector<2x64xf32>
    %65 = arith.mulf %63, %64 : vector<2x64xf32>
    %66 = math.tanh %65 : vector<2x64xf32>
    %cst_17 = arith.constant 5.000000e-01 : f32
    %67 = vector.broadcast %cst_17 : f32 to vector<2x64xf32>
    %68 = arith.mulf %67, %66 : vector<2x64xf32>
    %cst_18 = arith.constant 5.000000e-01 : f32
    %69 = vector.broadcast %cst_18 : f32 to vector<2x64xf32>
    %70 = arith.addf %68, %69 : vector<2x64xf32>
    %71 = vector.shape_cast %9 : vector<1x64xi1> to vector<1x64xi1>
    %72 = vector.broadcast %71 : vector<1x64xi1> to vector<2x64xi1>
    %73 = arith.select %72, %66, %70 : vector<2x64xi1>, vector<2x64xf32>
    %74 = vector.extract_strided_slice %73 {offsets = [0, 0], sizes = [2, 16], strides = [1, 1]} : vector<2x64xf32> to vector<2x16xf32>
    %75 = vector.extract_strided_slice %73 {offsets = [0, 16], sizes = [2, 16], strides = [1, 1]} : vector<2x64xf32> to vector<2x16xf32>
    %76 = vector.extract_strided_slice %73 {offsets = [0, 32], sizes = [2, 16], strides = [1, 1]} : vector<2x64xf32> to vector<2x16xf32>
    %77 = vector.extract_strided_slice %73 {offsets = [0, 48], sizes = [2, 16], strides = [1, 1]} : vector<2x64xf32> to vector<2x16xf32>
    %78 = arith.mulf %75, %55 : vector<2x16xf32>
    %79 = arith.mulf %74, %76 : vector<2x16xf32>
    %80 = arith.addf %78, %79 : vector<2x16xf32>
    %81 = math.tanh %80 : vector<2x16xf32>
    %82 = arith.mulf %77, %81 : vector<2x16xf32>
    %83 = vector.extract_strided_slice %0 {offsets = [0, 24], sizes = [2, 8], strides = [1, 1]} : vector<2x32xf32> to vector<2x8xf32>
    %cst_19 = arith.constant dense<0.000000e+00> : vector<2x64xf32>
    %84 = tpu.matmul %83, %1, %cst_19 {dimension_numbers = #tpu.dot_dimension_numbers<[1], [0], [0], [1], [0, 0, 1, 1], [], []>} : vector<2x8xf32>, vector<8x64xf32>, vector<2x64xf32> -> vector<2x64xf32>
    %85 = vector.broadcast %3 : vector<1x64xf32> to vector<2x64xf32>
    %86 = arith.addf %84, %85 : vector<2x64xf32>
    %cst_20 = arith.constant dense<0.000000e+00> : vector<2x64xf32>
    %87 = tpu.matmul %82, %2, %cst_20 {dimension_numbers = #tpu.dot_dimension_numbers<[1], [0], [0], [1], [0, 0, 1, 1], [], []>} : vector<2x16xf32>, vector<16x64xf32>, vector<2x64xf32> -> vector<2x64xf32>
    %88 = arith.addf %86, %87 : vector<2x64xf32>
    %89 = vector.broadcast %12 : vector<1x64xf32> to vector<2x64xf32>
    %90 = arith.mulf %88, %89 : vector<2x64xf32>
    %91 = math.tanh %90 : vector<2x64xf32>
    %cst_21 = arith.constant 5.000000e-01 : f32
    %92 = vector.broadcast %cst_21 : f32 to vector<2x64xf32>
    %93 = arith.mulf %92, %91 : vector<2x64xf32>
    %cst_22 = arith.constant 5.000000e-01 : f32
    %94 = vector.broadcast %cst_22 : f32 to vector<2x64xf32>
    %95 = arith.addf %93, %94 : vector<2x64xf32>
    %96 = vector.shape_cast %9 : vector<1x64xi1> to vector<1x64xi1>
    %97 = vector.broadcast %96 : vector<1x64xi1> to vector<2x64xi1>
    %98 = arith.select %97, %91, %95 : vector<2x64xi1>, vector<2x64xf32>
    %99 = vector.extract_strided_slice %98 {offsets = [0, 0], sizes = [2, 16], strides = [1, 1]} : vector<2x64xf32> to vector<2x16xf32>
    %100 = vector.extract_strided_slice %98 {offsets = [0, 16], sizes = [2, 16], strides = [1, 1]} : vector<2x64xf32> to vector<2x16xf32>
    %101 = vector.extract_strided_slice %98 {offsets = [0, 32], sizes = [2, 16], strides = [1, 1]} : vector<2x64xf32> to vector<2x16xf32>
    %102 = vector.extract_strided_slice %98 {offsets = [0, 48], sizes = [2, 16], strides = [1, 1]} : vector<2x64xf32> to vector<2x16xf32>
    %103 = arith.mulf %100, %80 : vector<2x16xf32>
    %104 = arith.mulf %99, %101 : vector<2x16xf32>
    %105 = arith.addf %103, %104 : vector<2x16xf32>
    %106 = math.tanh %105 : vector<2x16xf32>
    %107 = arith.mulf %102, %106 : vector<2x16xf32>
    %108 = vector.extract_strided_slice %0 {offsets = [0, 24], sizes = [2, 8], strides = [1, 1]} : vector<2x32xf32> to vector<2x8xf32>
    %c0_23 = arith.constant 0 : index
    %c0_24 = arith.constant 0 : index
    %109 = vector.load %arg5[%c0_23, %c0_24] : memref<8x64xf32, #tpu.memory_space<vmem>>, vector<8x64xf32>
    %cst_25 = arith.constant dense<0.000000e+00> : vector<2x64xf32>
    %110 = tpu.matmul %108, %109, %cst_25 {dimension_numbers = #tpu.dot_dimension_numbers<[1], [0], [0], [1], [0, 0, 1, 1], [], []>} : vector<2x8xf32>, vector<8x64xf32>, vector<2x64xf32> -> vector<2x64xf32>
    %c0_26 = arith.constant 0 : index
    %c0_27 = arith.constant 0 : index
    %111 = vector.load %arg6[%c0_26, %c0_27] : memref<1x64xf32, #tpu.memory_space<vmem>>, vector<1x64xf32>
    %112 = vector.broadcast %111 : vector<1x64xf32> to vector<2x64xf32>
    %113 = arith.addf %110, %112 : vector<2x64xf32>
    %114 = vector.broadcast %12 : vector<1x64xf32> to vector<2x64xf32>
    %115 = arith.mulf %113, %114 : vector<2x64xf32>
    %116 = math.tanh %115 : vector<2x64xf32>
    %cst_28 = arith.constant 5.000000e-01 : f32
    %117 = vector.broadcast %cst_28 : f32 to vector<2x64xf32>
    %118 = arith.mulf %117, %116 : vector<2x64xf32>
    %cst_29 = arith.constant 5.000000e-01 : f32
    %119 = vector.broadcast %cst_29 : f32 to vector<2x64xf32>
    %120 = arith.addf %118, %119 : vector<2x64xf32>
    %121 = vector.shape_cast %9 : vector<1x64xi1> to vector<1x64xi1>
    %122 = vector.broadcast %121 : vector<1x64xi1> to vector<2x64xi1>
    %123 = arith.select %122, %116, %120 : vector<2x64xi1>, vector<2x64xf32>
    %124 = vector.extract_strided_slice %123 {offsets = [0, 0], sizes = [2, 16], strides = [1, 1]} : vector<2x64xf32> to vector<2x16xf32>
    %125 = vector.extract_strided_slice %123 {offsets = [0, 32], sizes = [2, 16], strides = [1, 1]} : vector<2x64xf32> to vector<2x16xf32>
    %126 = vector.extract_strided_slice %123 {offsets = [0, 48], sizes = [2, 16], strides = [1, 1]} : vector<2x64xf32> to vector<2x16xf32>
    %127 = arith.mulf %124, %125 : vector<2x16xf32>
    %128 = math.tanh %127 : vector<2x16xf32>
    %129 = arith.mulf %126, %128 : vector<2x16xf32>
    %c0_30 = arith.constant 0 : index
    %c0_31 = arith.constant 0 : index
    %130 = vector.load %arg7[%c0_30, %c0_31] : memref<16x16xf32, #tpu.memory_space<vmem>>, vector<16x16xf32>
    %cst_32 = arith.constant dense<0.000000e+00> : vector<2x16xf32>
    %131 = tpu.matmul %107, %130, %cst_32 {dimension_numbers = #tpu.dot_dimension_numbers<[1], [0], [0], [1], [0, 0, 1, 1], [], []>} : vector<2x16xf32>, vector<16x16xf32>, vector<2x16xf32> -> vector<2x16xf32>
    %c0_33 = arith.constant 0 : index
    %c0_34 = arith.constant 0 : index
    %132 = vector.load %arg8[%c0_33, %c0_34] : memref<16x16xf32, #tpu.memory_space<vmem>>, vector<16x16xf32>
    %cst_35 = arith.constant dense<0.000000e+00> : vector<2x16xf32>
    %133 = tpu.matmul %129, %132, %cst_35 {dimension_numbers = #tpu.dot_dimension_numbers<[1], [0], [0], [1], [0, 0, 1, 1], [], []>} : vector<2x16xf32>, vector<16x16xf32>, vector<2x16xf32> -> vector<2x16xf32>
    %134 = arith.addf %131, %133 : vector<2x16xf32>
    %c0_36 = arith.constant 0 : index
    %c0_37 = arith.constant 0 : index
    %135 = vector.load %arg9[%c0_36, %c0_37] : memref<1x16xf32, #tpu.memory_space<vmem>>, vector<1x16xf32>
    %136 = vector.broadcast %135 : vector<1x16xf32> to vector<2x16xf32>
    %137 = arith.addf %134, %136 : vector<2x16xf32>
    %c0_38 = arith.constant 0 : index
    %c0_39 = arith.constant 0 : index
    %138 = vector.load %arg10[%c0_38, %c0_39] : memref<16x32xf32, #tpu.memory_space<vmem>>, vector<16x32xf32>
    %cst_40 = arith.constant dense<0.000000e+00> : vector<2x32xf32>
    %139 = tpu.matmul %137, %138, %cst_40 {dimension_numbers = #tpu.dot_dimension_numbers<[1], [0], [0], [1], [0, 0, 1, 1], [], []>} : vector<2x16xf32>, vector<16x32xf32>, vector<2x32xf32> -> vector<2x32xf32>
    %c0_41 = arith.constant 0 : index
    %c0_42 = arith.constant 0 : index
    %140 = vector.load %arg11[%c0_41, %c0_42] : memref<1x32xf32, #tpu.memory_space<vmem>>, vector<1x32xf32>
    %141 = vector.broadcast %140 : vector<1x32xf32> to vector<2x32xf32>
    %142 = arith.addf %139, %141 : vector<2x32xf32>
    %cst_43 = arith.constant 0.000000e+00 : f32
    %143 = vector.broadcast %cst_43 : f32 to vector<2x32xf32>
    %144 = arith.maximumf %142, %143 : vector<2x32xf32>
    %c0_44 = arith.constant 0 : index
    %c0_45 = arith.constant 0 : index
    %145 = vector.load %arg12[%c0_44, %c0_45] : memref<32x32xf32, #tpu.memory_space<vmem>>, vector<32x32xf32>
    %cst_46 = arith.constant dense<0.000000e+00> : vector<2x32xf32>
    %146 = tpu.matmul %144, %145, %cst_46 {dimension_numbers = #tpu.dot_dimension_numbers<[1], [0], [0], [1], [0, 0, 1, 1], [], []>} : vector<2x32xf32>, vector<32x32xf32>, vector<2x32xf32> -> vector<2x32xf32>
    %c0_47 = arith.constant 0 : index
    %c0_48 = arith.constant 0 : index
    %147 = vector.load %arg13[%c0_47, %c0_48] : memref<1x32xf32, #tpu.memory_space<vmem>>, vector<1x32xf32>
    %148 = vector.broadcast %147 : vector<1x32xf32> to vector<2x32xf32>
    %149 = arith.addf %146, %148 : vector<2x32xf32>
    %cst_49 = arith.constant 0.000000e+00 : f32
    %150 = vector.broadcast %cst_49 : f32 to vector<2x32xf32>
    %151 = arith.maximumf %149, %150 : vector<2x32xf32>
    %c0_50 = arith.constant 0 : index
    %c0_51 = arith.constant 0 : index
    %152 = vector.load %arg14[%c0_50, %c0_51] : memref<32x4xf32, #tpu.memory_space<vmem>>, vector<32x4xf32>
    %cst_52 = arith.constant dense<0.000000e+00> : vector<2x4xf32>
    %153 = tpu.matmul %151, %152, %cst_52 {dimension_numbers = #tpu.dot_dimension_numbers<[1], [0], [0], [1], [0, 0, 1, 1], [], []>} : vector<2x32xf32>, vector<32x4xf32>, vector<2x4xf32> -> vector<2x4xf32>
    %c0_53 = arith.constant 0 : index
    %c0_54 = arith.constant 0 : index
    %154 = vector.load %arg15[%c0_53, %c0_54] : memref<1x4xf32, #tpu.memory_space<vmem>>, vector<1x4xf32>
    %155 = vector.broadcast %154 : vector<1x4xf32> to vector<2x4xf32>
    %156 = arith.addf %153, %155 : vector<2x4xf32>
    %157 = math.tanh %156 : vector<2x4xf32>
    %cst_55 = arith.constant 1.000000e+00 : f32
    %158 = vector.broadcast %cst_55 : f32 to vector<2x4xf32>
    %159 = arith.mulf %158, %157 : vector<2x4xf32>
    %c0_56 = arith.constant 0 : index
    %c0_57 = arith.constant 0 : index
    %160 = vector.load %arg16[%c0_56, %c0_57] : memref<2x4xf32, #tpu.memory_space<vmem>>, vector<2x4xf32>
    tpu.vector_store %arg16[%c0_56, %c0_57], %159 {strides = array<i32>} : memref<2x4xf32, #tpu.memory_space<vmem>>, vector<2x4xf32>,
    return
  }
  func.func @transform_0(%arg0: i32) -> (i32, i32) {
    %c0_i32 = arith.constant 0 : i32
    %c0_i32_0 = arith.constant 0 : i32
    return %arg0, %c0_i32 : i32, i32
  }
  func.func @transform_1(%arg0: i32) -> (i32, i32) {
    %c0_i32 = arith.constant 0 : i32
    %c0_i32_0 = arith.constant 0 : i32
    %c0_i32_1 = arith.constant 0 : i32
    return %c0_i32, %c0_i32_0 : i32, i32
  }
  func.func @transform_2(%arg0: i32) -> (i32, i32) {
    %c0_i32 = arith.constant 0 : i32
    %c0_i32_0 = arith.constant 0 : i32
    %c0_i32_1 = arith.constant 0 : i32
    return %c0_i32, %c0_i32_0 : i32, i32
  }
  func.func @transform_3(%arg0: i32) -> (i32, i32) {
    %c0_i32 = arith.constant 0 : i32
    %c0_i32_0 = arith.constant 0 : i32
    %c0_i32_1 = arith.constant 0 : i32
    return %c0_i32, %c0_i32_0 : i32, i32
  }
  func.func @transform_4(%arg0: i32) -> (i32, i32) {
    %c0_i32 = arith.constant 0 : i32
    %c0_i32_0 = arith.constant 0 : i32
    %c0_i32_1 = arith.constant 0 : i32
    return %c0_i32, %c0_i32_0 : i32, i32
  }
  func.func @transform_5(%arg0: i32) -> (i32, i32) {
    %c0_i32 = arith.constant 0 : i32
    %c0_i32_0 = arith.constant 0 : i32
    %c0_i32_1 = arith.constant 0 : i32
    return %c0_i32, %c0_i32_0 : i32, i32
  }
  func.func @transform_6(%arg0: i32) -> (i32, i32) {
    %c0_i32 = arith.constant 0 : i32
    %c0_i32_0 = arith.constant 0 : i32
    %c0_i32_1 = arith.constant 0 : i32
    return %c0_i32, %c0_i32_0 : i32, i32
  }
  func.func @transform_7(%arg0: i32) -> (i32, i32) {
    %c0_i32 = arith.constant 0 : i32
    %c0_i32_0 = arith.constant 0 : i32
    %c0_i32_1 = arith.constant 0 : i32
    return %c0_i32, %c0_i32_0 : i32, i32
  }
  func.func @transform_8(%arg0: i32) -> (i32, i32) {
    %c0_i32 = arith.constant 0 : i32
    %c0_i32_0 = arith.constant 0 : i32
    %c0_i32_1 = arith.constant 0 : i32
    return %c0_i32, %c0_i32_0 : i32, i32
  }
  func.func @transform_9(%arg0: i32) -> (i32, i32) {
    %c0_i32 = arith.constant 0 : i32
    %c0_i32_0 = arith.constant 0 : i32
    %c0_i32_1 = arith.constant 0 : i32
    return %c0_i32, %c0_i32_0 : i32, i32
  }
  func.func @transform_10(%arg0: i32) -> (i32, i32) {
    %c0_i32 = arith.constant 0 : i32
    %c0_i32_0 = arith.constant 0 : i32
    %c0_i32_1 = arith.constant 0 : i32
    return %c0_i32, %c0_i32_0 : i32, i32
  }
  func.func @transform_11(%arg0: i32) -> (i32, i32) {
    %c0_i32 = arith.constant 0 : i32
    %c0_i32_0 = arith.constant 0 : i32
    %c0_i32_1 = arith.constant 0 : i32
    return %c0_i32, %c0_i32_0 : i32, i32
  }
  func.func @transform_12(%arg0: i32) -> (i32, i32) {
    %c0_i32 = arith.constant 0 : i32
    %c0_i32_0 = arith.constant 0 : i32
    %c0_i32_1 = arith.constant 0 : i32
    return %c0_i32, %c0_i32_0 : i32, i32
  }
  func.func @transform_13(%arg0: i32) -> (i32, i32) {
    %c0_i32 = arith.constant 0 : i32
    %c0_i32_0 = arith.constant 0 : i32
    %c0_i32_1 = arith.constant 0 : i32
    return %c0_i32, %c0_i32_0 : i32, i32
  }
  func.func @transform_14(%arg0: i32) -> (i32, i32) {
    %c0_i32 = arith.constant 0 : i32
    %c0_i32_0 = arith.constant 0 : i32
    %c0_i32_1 = arith.constant 0 : i32
    return %c0_i32, %c0_i32_0 : i32, i32
  }
  func.func @transform_15(%arg0: i32) -> (i32, i32) {
    %c0_i32 = arith.constant 0 : i32
    %c0_i32_0 = arith.constant 0 : i32
    return %arg0, %c0_i32 : i32, i32
  }
}

</mosaic_0001>

<llo_original>
// kernel: tpu_custom_call.1
$region0: #{tpu_custom_call.1}
  #allocation0 [shape = 'u32[]', space=smem, size = 0x4, offset = 0x4, fixed_abs, tag = 'smem constant byte address 0x4 - core index']
  #allocation1 [shape = 'u32[72,128]{1,0:T(1,128)}', space=vmem, size = 0x9000, scoped, tag = 'internal scratch']
  %s0 = inlined_call_operand.vmem [shape: f32[2,32], index: 0, kind: input, shape index: {}]
  %s1 = inlined_call_operand.hbm [shape: f32[8,64], index: 1, kind: input, shape index: {}]
  %s2 = inlined_call_operand.hbm [shape: f32[16,64], index: 2, kind: input, shape index: {}]
  %s3 = inlined_call_operand.vmem [shape: f32[1,64], index: 3, kind: input, shape index: {}]
  %s4 = inlined_call_operand.hbm [shape: f32[8,64], index: 4, kind: input, shape index: {}]
  %s5 = inlined_call_operand.vmem [shape: f32[1,64], index: 5, kind: input, shape index: {}]
  %s6 = inlined_call_operand.hbm [shape: f32[16,16], index: 6, kind: input, shape index: {}]
  %s7 = inlined_call_operand.hbm [shape: f32[16,16], index: 7, kind: input, shape index: {}]
  %s8 = inlined_call_operand.vmem [shape: f32[1,16], index: 8, kind: input, shape index: {}]
  %s9 = inlined_call_operand.hbm [shape: f32[16,32], index: 9, kind: input, shape index: {}]
  %s10 = inlined_call_operand.vmem [shape: f32[1,32], index: 10, kind: input, shape index: {}]
  %s11 = inlined_call_operand.vmem [shape: f32[32,32], index: 11, kind: input, shape index: {}]
  %s12 = inlined_call_operand.vmem [shape: f32[1,32], index: 12, kind: input, shape index: {}]
  %s13 = inlined_call_operand.vmem [shape: f32[32,4], index: 13, kind: input, shape index: {}]
  %s14 = inlined_call_operand.vmem [shape: f32[1,4], index: 14, kind: input, shape index: {}]
  %s15 = inlined_call_operand.hbm [shape: f32[2,4], index: 15, kind: output, shape index: {}]
  %s16 = sld [smem:[#allocation0]]
  $region94: #{tpu_custom_call.1} parent=0
    _
  %s18 = ssub.s32 1, %s16
  %s19 = scalar_select 0, %s18, %s16
  $region1: #{tpu_custom_call.1} parent=0
    #allocation2 [shape = 'u8[4096]{0}', space=vmem, size = 0x1000, scoped, tag = 'input window, operand 1, single buffered']
    #allocation3 [shape = 's32[1]{0}', space=sflag, size = 0x4, scoped, tag = 'scoped memory for tpu_custom_call.1']
    #allocation4 [shape = 's32[1]{0}', space=sflag, size = 0x4, scoped, tag = 'scoped memory for tpu_custom_call.1']
    #allocation5 [shape = 'u8[8192]{0}', space=vmem, size = 0x2000, scoped, tag = 'input window, operand 2, single buffered']
    #allocation6 [shape = 's32[1]{0}', space=sflag, size = 0x4, scoped, tag = 'scoped memory for tpu_custom_call.1']
    #allocation7 [shape = 'u8[4096]{0}', space=vmem, size = 0x1000, scoped, tag = 'input window, operand 4, single buffered']
    #allocation8 [shape = 'u8[8192]{0}', space=vmem, size = 0x2000, scoped, tag = 'input window, operand 6, single buffered']
    #allocation9 [shape = 's32[1]{0}', space=sflag, size = 0x4, scoped, tag = 'scoped memory for tpu_custom_call.1']
    #allocation10 [shape = 'u8[8192]{0}', space=vmem, size = 0x2000, scoped, tag = 'input window, operand 7, single buffered']
    #allocation11 [shape = 'u8[8192]{0}', space=vmem, size = 0x2000, scoped, tag = 'input window, operand 9, single buffered']
    #allocation12 [shape = 's32[1]{0}', space=sflag, size = 0x4, scoped, tag = 'scoped memory for tpu_custom_call.1']
    #allocation13 [shape = 'u8[1024]{0}', space=vmem, size = 0x400, scoped, tag = 'output window, operand 0, single buffered']
    %20 = vsyncpa [#allocation3], 0
    %21 = vsyncpa [#allocation6], 0
    %22 = vsyncpa [#allocation9], 0
    %23 = vsyncpa [#allocation12], 0
    %24 = vsyncpa [#allocation4], 0
    // Predicated region
    $region2: #{tpu_custom_call.1} parent=1 // pred_check
      _
    $region3: #{tpu_custom_call.1} parent=1 // pred_check_branch
      %26 = sbr.rel (0) target = $region5
    $region4: #{tpu_custom_call.1} parent=1 // pred_region
      _
    $region5: #{tpu_custom_call.1} parent=1 // pred_fallthru
      _
    // Predicated region
    $region6: #{tpu_custom_call.1} parent=1 // pred_check
      _
    $region7: #{tpu_custom_call.1} parent=1 // pred_check_branch
      %28 = sbr.rel (0) target = $region9
    $region8: #{tpu_custom_call.1} parent=1 // pred_region
      %30 = vsyncadd [#allocation3], 0
      %s32 = sshll.u32 %s1, 4
      %s33 = int_to_ptr.hbm [resolvable:$true] %s32
      %s34 = sshll.u32 [#allocation2], 4
      %s35 = int_to_ptr.vmem [resolvable:$true] %s34
      %37 = dma.hbm_to_vmem [thread:$0]  %s33, 128, %s35, [#allocation3]
    $region9: #{tpu_custom_call.1} parent=1 // pred_fallthru
      _
    // Predicated region
    $region10: #{tpu_custom_call.1} parent=1 // pred_check
      _
    $region11: #{tpu_custom_call.1} parent=1 // pred_check_branch
      %39 = sbr.rel (0) target = $region13
    $region12: #{tpu_custom_call.1} parent=1 // pred_region
      %41 = vsyncadd [#allocation6], 0
      %s42 = sshll.u32 %s2, 4
      %s43 = int_to_ptr.hbm [resolvable:$true] %s42
      %s44 = sshll.u32 [#allocation5], 4
      %s45 = int_to_ptr.vmem [resolvable:$true] %s44
      %50 = dma.hbm_to_vmem [thread:$0]  %s43, 256, %s45, [#allocation6], 128, 128, 8
    $region13: #{tpu_custom_call.1} parent=1 // pred_fallthru
      _
    // Predicated region
    $region14: #{tpu_custom_call.1} parent=1 // pred_check
      _
    $region15: #{tpu_custom_call.1} parent=1 // pred_check_branch
      %52 = sbr.rel (0) target = $region17
    $region16: #{tpu_custom_call.1} parent=1 // pred_region
      _
    $region17: #{tpu_custom_call.1} parent=1 // pred_fallthru
      _
    // Predicated region
    $region18: #{tpu_custom_call.1} parent=1 // pred_check
      _
    $region19: #{tpu_custom_call.1} parent=1 // pred_check_branch
      %54 = sbr.rel (0) target = $region21
    $region20: #{tpu_custom_call.1} parent=1 // pred_region
      %56 = vsyncadd [#allocation6], 0
      %s58 = sshll.u32 %s4, 4
      %s59 = int_to_ptr.hbm [resolvable:$true] %s58
      %s60 = sshll.u32 [#allocation7], 4
      %s61 = int_to_ptr.vmem [resolvable:$true] %s60
      %63 = dma.hbm_to_vmem [thread:$0]  %s59, 128, %s61, [#allocation6]
    $region21: #{tpu_custom_call.1} parent=1 // pred_fallthru
      _
    // Predicated region
    $region22: #{tpu_custom_call.1} parent=1 // pred_check
      _
    $region23: #{tpu_custom_call.1} parent=1 // pred_check_branch
      %65 = sbr.rel (0) target = $region25
    $region24: #{tpu_custom_call.1} parent=1 // pred_region
      _
    $region25: #{tpu_custom_call.1} parent=1 // pred_fallthru
      _
    // Predicated region
    $region26: #{tpu_custom_call.1} parent=1 // pred_check
      _
    $region27: #{tpu_custom_call.1} parent=1 // pred_check_branch
      %67 = sbr.rel (0) target = $region29
    $region28: #{tpu_custom_call.1} parent=1 // pred_region
      %69 = vsyncadd [#allocation9], 0
      %s70 = sshll.u32 %s6, 4
      %s71 = int_to_ptr.hbm [resolvable:$true] %s70
      %s72 = sshll.u32 [#allocation8], 4
      %s73 = int_to_ptr.vmem [resolvable:$true] %s72
      %78 = dma.hbm_to_vmem [thread:$0]  %s71, 256, %s73, [#allocation9], 128, 128, 8
    $region29: #{tpu_custom_call.1} parent=1 // pred_fallthru
      _
    // Predicated region
    $region30: #{tpu_custom_call.1} parent=1 // pred_check
      _
    $region31: #{tpu_custom_call.1} parent=1 // pred_check_branch
      %80 = sbr.rel (0) target = $region33
    $region32: #{tpu_custom_call.1} parent=1 // pred_region
      %82 = vsyncadd [#allocation9], 0
      %s83 = sshll.u32 %s7, 4
      %s84 = int_to_ptr.hbm [resolvable:$true] %s83
      %s85 = sshll.u32 [#allocation10], 4
      %s86 = int_to_ptr.vmem [resolvable:$true] %s85
      %91 = dma.hbm_to_vmem [thread:$0]  %s84, 256, %s86, [#allocation9], 128, 128, 8
    $region33: #{tpu_custom_call.1} parent=1 // pred_fallthru
      _
    // Predicated region
    $region34: #{tpu_custom_call.1} parent=1 // pred_check
      _
    $region35: #{tpu_custom_call.1} parent=1 // pred_check_branch
      %93 = sbr.rel (0) target = $region37
    $region36: #{tpu_custom_call.1} parent=1 // pred_region
      _
    $region37: #{tpu_custom_call.1} parent=1 // pred_fallthru
      _
    // Predicated region
    $region38: #{tpu_custom_call.1} parent=1 // pred_check
      _
    $region39: #{tpu_custom_call.1} parent=1 // pred_check_branch
      %95 = sbr.rel (0) target = $region41
    $region40: #{tpu_custom_call.1} parent=1 // pred_region
      %97 = vsyncadd [#allocation12], 0
      %s98 = sshll.u32 %s9, 4
      %s99 = int_to_ptr.hbm [resolvable:$true] %s98
      %s100 = sshll.u32 [#allocation11], 4
      %s101 = int_to_ptr.vmem [resolvable:$true] %s100
      %106 = dma.hbm_to_vmem [thread:$0]  %s99, 256, %s101, [#allocation12], 128, 128, 8
    $region41: #{tpu_custom_call.1} parent=1 // pred_fallthru
      _
    // Predicated region
    $region42: #{tpu_custom_call.1} parent=1 // pred_check
      _
    $region43: #{tpu_custom_call.1} parent=1 // pred_check_branch
      %108 = sbr.rel (0) target = $region45
    $region44: #{tpu_custom_call.1} parent=1 // pred_region
      _
    $region45: #{tpu_custom_call.1} parent=1 // pred_fallthru
      _
    // Predicated region
    $region46: #{tpu_custom_call.1} parent=1 // pred_check
      _
    $region47: #{tpu_custom_call.1} parent=1 // pred_check_branch
      %110 = sbr.rel (0) target = $region49
    $region48: #{tpu_custom_call.1} parent=1 // pred_region
      _
    $region49: #{tpu_custom_call.1} parent=1 // pred_fallthru
      _
    // Predicated region
    $region50: #{tpu_custom_call.1} parent=1 // pred_check
      _
    $region51: #{tpu_custom_call.1} parent=1 // pred_check_branch
      %112 = sbr.rel (0) target = $region53
    $region52: #{tpu_custom_call.1} parent=1 // pred_region
      _
    $region53: #{tpu_custom_call.1} parent=1 // pred_fallthru
      _
    // Predicated region
    $region54: #{tpu_custom_call.1} parent=1 // pred_check
      _
    $region55: #{tpu_custom_call.1} parent=1 // pred_check_branch
      %114 = sbr.rel (0) target = $region57
    $region56: #{tpu_custom_call.1} parent=1 // pred_region
      _
    $region57: #{tpu_custom_call.1} parent=1 // pred_fallthru
      _
    // Predicated region
    $region58: #{tpu_custom_call.1} parent=1 // pred_check
      _
    $region59: #{tpu_custom_call.1} parent=1 // pred_check_branch
      %116 = sbr.rel (0) target = $region61
    $region60: #{tpu_custom_call.1} parent=1 // pred_region
      _
    $region61: #{tpu_custom_call.1} parent=1 // pred_fallthru
      _
    // Predicated region
    $region62: #{tpu_custom_call.1} parent=1 // pred_check
      _
    $region63: #{tpu_custom_call.1} parent=1 // pred_check_branch
      %118 = sbr.rel (0) target = $region65
    $region64: #{tpu_custom_call.1} parent=1 // pred_region
      %120 = dma.done [#allocation3], 128
    $region65: #{tpu_custom_call.1} parent=1 // pred_fallthru
      _
    // Predicated region
    $region66: #{tpu_custom_call.1} parent=1 // pred_check
      _
    $region67: #{tpu_custom_call.1} parent=1 // pred_check_branch
      %122 = sbr.rel (0) target = $region69
    $region68: #{tpu_custom_call.1} parent=1 // pred_region
      %124 = dma.done [#allocation6], 256
    $region69: #{tpu_custom_call.1} parent=1 // pred_fallthru
      _
    // Predicated region
    $region70: #{tpu_custom_call.1} parent=1 // pred_check
      _
    $region71: #{tpu_custom_call.1} parent=1 // pred_check_branch
      %126 = sbr.rel (0) target = $region73
    $region72: #{tpu_custom_call.1} parent=1 // pred_region
      %128 = dma.done [#allocation6], 128
    $region73: #{tpu_custom_call.1} parent=1 // pred_fallthru
      _
    // Predicated region
    $region74: #{tpu_custom_call.1} parent=1 // pred_check
      _
    $region75: #{tpu_custom_call.1} parent=1 // pred_check_branch
      %130 = sbr.rel (0) target = $region77
    $region76: #{tpu_custom_call.1} parent=1 // pred_region
      %132 = dma.done [#allocation9], 256
    $region77: #{tpu_custom_call.1} parent=1 // pred_fallthru
      _
    // Predicated region
    $region78: #{tpu_custom_call.1} parent=1 // pred_check
      _
    $region79: #{tpu_custom_call.1} parent=1 // pred_check_branch
      %134 = sbr.rel (0) target = $region81
    $region80: #{tpu_custom_call.1} parent=1 // pred_region
      %136 = dma.done [#allocation9], 256
    $region81: #{tpu_custom_call.1} parent=1 // pred_fallthru
      _
    // Predicated region
    $region82: #{tpu_custom_call.1} parent=1 // pred_check
      _
    $region83: #{tpu_custom_call.1} parent=1 // pred_check_branch
      %138 = sbr.rel (0) target = $region85
    $region84: #{tpu_custom_call.1} parent=1 // pred_region
      %140 = dma.done [#allocation12], 256
    $region85: #{tpu_custom_call.1} parent=1 // pred_fallthru
      _
    %v141 = vld [vmem:[%s0] sm:$0x3]
    %v142 = vld [vmem:[#allocation2] sm:$0xff]
    %v143 = vld [vmem:[#allocation5] sm:$0xff]
    %v144 = vld [vmem:[#allocation5 + $0x8] sm:$0xff]
    %v145 = vld [vmem:[%s3] sm:$0x1]
    %v146 = vlaneseq
    %v147 = vand.u32 %v146, 127
    %vm148 = vcmp.ge.s32.totalorder %v147, 32
    %vm149 = vcmp.lt.s32.totalorder %v147, 48
    %vm150 = vmand %vm148, %vm149
    %v151 = vsel %vm150, 1.0, 0.5
    %v153 = vperm.slane %v145, 0
    %vm155 = vcmask 64512
    %v157 = vsel %vm155, %v141, 0
    %159 = vmatpush.msra.mxu0 0.0
    %160 = vmatpush.msra.mxu0 0.0
    %161 = vmatpush.msra.mxu0 0.0
    %162 = vmatpush.msra.mxu0 0.0
    %163 = vmatpush.msra.mxu0 0.0
    %164 = vmatpush.msra.mxu0 0.0
    %165 = vmatpush.msra.mxu0 0.0
    %166 = vmatpush.msra.mxu0 0.0
    %167 = vmatpush.msra.mxu0 0.0
    %168 = vmatpush.msra.mxu0 0.0
    %169 = vmatpush.msra.mxu0 0.0
    %170 = vmatpush.msra.mxu0 0.0
    %171 = vmatpush.msra.mxu0 0.0
    %172 = vmatpush.msra.mxu0 0.0
    %173 = vmatpush.msra.mxu0 0.0
    %174 = vmatpush.msra.mxu0 %v142
    %175 = vmatmul.f32.gmra.mxu0 %v157
    %v176 = vpop.f32.mrf.mxu0
    %v177 = vadd.f32 %v153, %v176
    %178 = vdwg.mxu0
    %v179 = vmul.f32 %v177, %v151
    %v180 = vtanh.pop %v179
    %v181 = vmul.f32 %v180, 0.5
    %v182 = vadd.f32 %v181, 0.5
    %v183 = vsel %vm150, 1, 0
    %vm184 = vcmp.eq.s32.totalorder %v183, 1
    %v185 = vsel %vm184, %v180, %v182
    %187 = vrot.lane.b32.xlu0 %v185, 96
    %v188 = vpop.permute.xlu0 %187
    %v190 = vmul.f32 %v185, %v188
    %v191 = vtanh.pop %v190
    %193 = vrot.lane.b32.xlu0 %v191, 48
    %v194 = vpop.permute.xlu0 %193
    %v196 = vmul.f32 %v185, %v194
    %197 = vrot.lane.b32.xlu0 %v141, 120
    %v198 = vpop.permute.xlu0 %197
    %v199 = vsel %vm155, %v198, 0
    %201 = vmatpush.msra.mxu0 0.0
    %202 = vmatpush.msra.mxu0 0.0
    %203 = vmatpush.msra.mxu0 0.0
    %204 = vmatpush.msra.mxu0 0.0
    %205 = vmatpush.msra.mxu0 0.0
    %206 = vmatpush.msra.mxu0 0.0
    %207 = vmatpush.msra.mxu0 0.0
    %208 = vmatpush.msra.mxu0 0.0
    %209 = vmatpush.msra.mxu0 0.0
    %210 = vmatpush.msra.mxu0 0.0
    %211 = vmatpush.msra.mxu0 0.0
    %212 = vmatpush.msra.mxu0 0.0
    %213 = vmatpush.msra.mxu0 0.0
    %214 = vmatpush.msra.mxu0 0.0
    %215 = vmatpush.msra.mxu0 0.0
    %216 = vmatpush.msra.mxu0 %v142
    %217 = vmatmul.f32.gmra.mxu0 %v199
    %v218 = vpop.f32.mrf.mxu0
    %v219 = vadd.f32 %v153, %v218
    %220 = vdwg.mxu0
    %222 = vrot.lane.b32.xlu0 %v196, 80
    %v223 = vpop.permute.xlu0 %222
    %vm224 = vcmask 130048
    %v225 = vsel %vm224, %v223, 0
    %227 = vmatpush.msra.mxu0 0.0
    %228 = vmatpush.msra.mxu0 0.0
    %229 = vmatpush.msra.mxu0 0.0
    %230 = vmatpush.msra.mxu0 0.0
    %231 = vmatpush.msra.mxu0 0.0
    %232 = vmatpush.msra.mxu0 0.0
    %233 = vmatpush.msra.mxu0 0.0
    %234 = vmatpush.msra.mxu0 0.0
    %235 = vmatpush.msra.mxu0 0.0
    %236 = vmatpush.msra.mxu0 0.0
    %237 = vmatpush.msra.mxu0 0.0
    %238 = vmatpush.msra.mxu0 0.0
    %239 = vmatpush.msra.mxu0 0.0
    %240 = vmatpush.msra.mxu0 0.0
    %241 = vmatpush.msra.mxu0 %v144
    %242 = vmatpush.msra.mxu0 %v143
    %243 = vmatmul.f32.gmra.mxu0 %v225
    %v244 = vpop.f32.mrf.mxu0
    %v245 = vadd.f32 0.0, %v244
    %246 = vdwg.mxu0
    %v247 = vadd.f32 %v219, %v245
    %v248 = vmul.f32 %v247, %v151
    %v249 = vtanh.pop %v248
    %v250 = vmul.f32 %v249, 0.5
    %v251 = vadd.f32 %v250, 0.5
    %v252 = vsel %vm184, %v249, %v251
    %254 = vrot.lane.b32.xlu0 %v190, 16
    %v255 = vpop.permute.xlu0 %254
    %v257 = vmul.f32 %v252, %v255
    %259 = vrot.lane.b32.xlu0 %v252, 96
    %v260 = vpop.permute.xlu0 %259
    %v262 = vmul.f32 %v252, %v260
    %264 = vrot.lane.b32.xlu0 %v262, 16
    %v265 = vpop.permute.xlu0 %264
    %v267 = vadd.f32 %v257, %v265
    %v268 = vtanh.pop %v267
    %270 = vrot.lane.b32.xlu0 %v268, 32
    %v271 = vpop.permute.xlu0 %270
    %v273 = vmul.f32 %v252, %v271
    %274 = vrot.lane.b32.xlu0 %v141, 112
    %v275 = vpop.permute.xlu0 %274
    %v276 = vsel %vm155, %v275, 0
    %278 = vmatpush.msra.mxu0 0.0
    %279 = vmatpush.msra.mxu0 0.0
    %280 = vmatpush.msra.mxu0 0.0
    %281 = vmatpush.msra.mxu0 0.0
    %282 = vmatpush.msra.mxu0 0.0
    %283 = vmatpush.msra.mxu0 0.0
    %284 = vmatpush.msra.mxu0 0.0
    %285 = vmatpush.msra.mxu0 0.0
    %286 = vmatpush.msra.mxu0 0.0
    %287 = vmatpush.msra.mxu0 0.0
    %288 = vmatpush.msra.mxu0 0.0
    %289 = vmatpush.msra.mxu0 0.0
    %290 = vmatpush.msra.mxu0 0.0
    %291 = vmatpush.msra.mxu0 0.0
    %292 = vmatpush.msra.mxu0 0.0
    %293 = vmatpush.msra.mxu0 %v142
    %294 = vmatmul.f32.gmra.mxu0 %v276
    %v295 = vpop.f32.mrf.mxu0
    %v296 = vadd.f32 %v153, %v295
    %297 = vdwg.mxu0
    %299 = vrot.lane.b32.xlu0 %v273, 80
    %v300 = vpop.permute.xlu0 %299
    %v301 = vsel %vm224, %v300, 0
    %303 = vmatpush.msra.mxu0 0.0
    %304 = vmatpush.msra.mxu0 0.0
    %305 = vmatpush.msra.mxu0 0.0
    %306 = vmatpush.msra.mxu0 0.0
    %307 = vmatpush.msra.mxu0 0.0
    %308 = vmatpush.msra.mxu0 0.0
    %309 = vmatpush.msra.mxu0 0.0
    %310 = vmatpush.msra.mxu0 0.0
    %311 = vmatpush.msra.mxu0 0.0
    %312 = vmatpush.msra.mxu0 0.0
    %313 = vmatpush.msra.mxu0 0.0
    %314 = vmatpush.msra.mxu0 0.0
    %315 = vmatpush.msra.mxu0 0.0
    %316 = vmatpush.msra.mxu0 0.0
    %317 = vmatpush.msra.mxu0 %v144
    %318 = vmatpush.msra.mxu0 %v143
    %319 = vmatmul.f32.gmra.mxu0 %v301
    %v320 = vpop.f32.mrf.mxu0
    %v321 = vadd.f32 0.0, %v320
    %322 = vdwg.mxu0
    %v323 = vadd.f32 %v296, %v321
    %v324 = vmul.f32 %v323, %v151
    %v325 = vtanh.pop %v324
    %v326 = vmul.f32 %v325, 0.5
    %v327 = vadd.f32 %v326, 0.5
    %v328 = vsel %vm184, %v325, %v327
    %v329 = vmul.f32 %v328, %v267
    %331 = vrot.lane.b32.xlu0 %v328, 96
    %v332 = vpop.permute.xlu0 %331
    %v334 = vmul.f32 %v328, %v332
    %336 = vrot.lane.b32.xlu0 %v334, 16
    %v337 = vpop.permute.xlu0 %336
    %v339 = vadd.f32 %v329, %v337
    %v340 = vtanh.pop %v339
    %342 = vrot.lane.b32.xlu0 %v340, 32
    %v343 = vpop.permute.xlu0 %342
    %v345 = vmul.f32 %v328, %v343
    %346 = vrot.lane.b32.xlu0 %v141, 104
    %v347 = vpop.permute.xlu0 %346
    %v348 = vsel %vm155, %v347, 0
    %350 = vmatpush.msra.mxu0 0.0
    %351 = vmatpush.msra.mxu0 0.0
    %352 = vmatpush.msra.mxu0 0.0
    %353 = vmatpush.msra.mxu0 0.0
    %354 = vmatpush.msra.mxu0 0.0
    %355 = vmatpush.msra.mxu0 0.0
    %356 = vmatpush.msra.mxu0 0.0
    %357 = vmatpush.msra.mxu0 0.0
    %358 = vmatpush.msra.mxu0 0.0
    %359 = vmatpush.msra.mxu0 0.0
    %360 = vmatpush.msra.mxu0 0.0
    %361 = vmatpush.msra.mxu0 0.0
    %362 = vmatpush.msra.mxu0 0.0
    %363 = vmatpush.msra.mxu0 0.0
    %364 = vmatpush.msra.mxu0 0.0
    %365 = vmatpush.msra.mxu0 %v142
    %366 = vmatmul.f32.gmra.mxu0 %v348
    %v367 = vpop.f32.mrf.mxu0
    %v368 = vadd.f32 %v153, %v367
    %369 = vdwg.mxu0
    %371 = vrot.lane.b32.xlu0 %v345, 80
    %v372 = vpop.permute.xlu0 %371
    %v373 = vsel %vm224, %v372, 0
    %375 = vmatpush.msra.mxu0 0.0
    %376 = vmatpush.msra.mxu0 0.0
    %377 = vmatpush.msra.mxu0 0.0
    %378 = vmatpush.msra.mxu0 0.0
    %379 = vmatpush.msra.mxu0 0.0
    %380 = vmatpush.msra.mxu0 0.0
    %381 = vmatpush.msra.mxu0 0.0
    %382 = vmatpush.msra.mxu0 0.0
    %383 = vmatpush.msra.mxu0 0.0
    %384 = vmatpush.msra.mxu0 0.0
    %385 = vmatpush.msra.mxu0 0.0
    %386 = vmatpush.msra.mxu0 0.0
    %387 = vmatpush.msra.mxu0 0.0
    %388 = vmatpush.msra.mxu0 0.0
    %389 = vmatpush.msra.mxu0 %v144
    %390 = vmatpush.msra.mxu0 %v143
    %391 = vmatmul.f32.gmra.mxu0 %v373
    %v392 = vpop.f32.mrf.mxu0
    %v393 = vadd.f32 0.0, %v392
    %394 = vdwg.mxu0
    %v395 = vadd.f32 %v368, %v393
    %v396 = vmul.f32 %v395, %v151
    %v397 = vtanh.pop %v396
    %v398 = vmul.f32 %v397, 0.5
    %v399 = vadd.f32 %v398, 0.5
    %v400 = vsel %vm184, %v397, %v399
    %v401 = vmul.f32 %v400, %v339
    %403 = vrot.lane.b32.xlu0 %v400, 96
    %v404 = vpop.permute.xlu0 %403
    %v406 = vmul.f32 %v400, %v404
    %408 = vrot.lane.b32.xlu0 %v406, 16
    %v409 = vpop.permute.xlu0 %408
    %v411 = vadd.f32 %v401, %v409
    %v412 = vtanh.pop %v411
    %414 = vrot.lane.b32.xlu0 %v412, 32
    %v415 = vpop.permute.xlu0 %414
    %v417 = vmul.f32 %v400, %v415
    %v418 = vld [vmem:[#allocation7] sm:$0xff]
    %v419 = vld [vmem:[%s5] sm:$0x1]
    %v421 = vperm.slane %v419, 0
    %423 = vmatpush.msra.mxu0 0.0
    %424 = vmatpush.msra.mxu0 0.0
    %425 = vmatpush.msra.mxu0 0.0
    %426 = vmatpush.msra.mxu0 0.0
    %427 = vmatpush.msra.mxu0 0.0
    %428 = vmatpush.msra.mxu0 0.0
    %429 = vmatpush.msra.mxu0 0.0
    %430 = vmatpush.msra.mxu0 0.0
    %431 = vmatpush.msra.mxu0 0.0
    %432 = vmatpush.msra.mxu0 0.0
    %433 = vmatpush.msra.mxu0 0.0
    %434 = vmatpush.msra.mxu0 0.0
    %435 = vmatpush.msra.mxu0 0.0
    %436 = vmatpush.msra.mxu0 0.0
    %437 = vmatpush.msra.mxu0 0.0
    %438 = vmatpush.msra.mxu0 %v418
    %439 = vmatmul.f32.gmra.mxu0 %v348
    %v440 = vpop.f32.mrf.mxu0
    %v441 = vadd.f32 %v421, %v440
    %442 = vdwg.mxu0
    %v443 = vmul.f32 %v441, %v151
    %v444 = vtanh.pop %v443
    %v445 = vmul.f32 %v444, 0.5
    %v446 = vadd.f32 %v445, 0.5
    %v447 = vsel %vm184, %v444, %v446
    %449 = vrot.lane.b32.xlu0 %v447, 96
    %v450 = vpop.permute.xlu0 %449
    %v452 = vmul.f32 %v447, %v450
    %v453 = vtanh.pop %v452
    %455 = vrot.lane.b32.xlu0 %v453, 48
    %v456 = vpop.permute.xlu0 %455
    %v458 = vmul.f32 %v447, %v456
    %v459 = vld [vmem:[#allocation8] sm:$0xff]
    %v460 = vld [vmem:[#allocation8 + $0x8] sm:$0xff]
    %v461 = vld [vmem:[#allocation10] sm:$0xff]
    %v462 = vld [vmem:[#allocation10 + $0x8] sm:$0xff]
    %464 = vrot.lane.b32.xlu0 %v458, 80
    %v465 = vpop.permute.xlu0 %464
    %v466 = vsel %vm224, %v465, 0
    %468 = vmatpush.msra.mxu0 0.0
    %469 = vmatpush.msra.mxu0 0.0
    %470 = vmatpush.msra.mxu0 0.0
    %471 = vmatpush.msra.mxu0 0.0
    %472 = vmatpush.msra.mxu0 0.0
    %473 = vmatpush.msra.mxu0 0.0
    %474 = vmatpush.msra.mxu0 0.0
    %475 = vmatpush.msra.mxu0 0.0
    %476 = vmatpush.msra.mxu0 0.0
    %477 = vmatpush.msra.mxu0 0.0
    %478 = vmatpush.msra.mxu0 0.0
    %479 = vmatpush.msra.mxu0 0.0
    %480 = vmatpush.msra.mxu0 0.0
    %481 = vmatpush.msra.mxu0 0.0
    %482 = vmatpush.msra.mxu0 %v462
    %483 = vmatpush.msra.mxu0 %v461
    %484 = vmatmul.f32.gmra.mxu0 %v466
    %v485 = vpop.f32.mrf.mxu0
    %v486 = vadd.f32 0.0, %v485
    %487 = vdwg.mxu0
    %489 = vrot.lane.b32.xlu0 %v417, 80
    %v490 = vpop.permute.xlu0 %489
    %v491 = vsel %vm224, %v490, 0
    %493 = vmatpush.msra.mxu0 0.0
    %494 = vmatpush.msra.mxu0 0.0
    %495 = vmatpush.msra.mxu0 0.0
    %496 = vmatpush.msra.mxu0 0.0
    %497 = vmatpush.msra.mxu0 0.0
    %498 = vmatpush.msra.mxu0 0.0
    %499 = vmatpush.msra.mxu0 0.0
    %500 = vmatpush.msra.mxu0 0.0
    %501 = vmatpush.msra.mxu0 0.0
    %502 = vmatpush.msra.mxu0 0.0
    %503 = vmatpush.msra.mxu0 0.0
    %504 = vmatpush.msra.mxu0 0.0
    %505 = vmatpush.msra.mxu0 0.0
    %506 = vmatpush.msra.mxu0 0.0
    %507 = vmatpush.msra.mxu0 %v460
    %508 = vmatpush.msra.mxu0 %v459
    %509 = vmatmul.f32.gmra.mxu0 %v491
    %v510 = vpop.f32.mrf.mxu0
    %v511 = vadd.f32 %v486, %v510
    %512 = vdwg.mxu0
    %v513 = vld [vmem:[%s8] sm:$0x1]
    %v515 = vperm.slane %v513, 0
    %v517 = vadd.f32 %v511, %v515
    %v518 = vld [vmem:[#allocation11] sm:$0xff]
    %v519 = vld [vmem:[#allocation11 + $0x8] sm:$0xff]
    %v520 = vld [vmem:[%s10] sm:$0x1]
    %v522 = vperm.slane %v520, 0
    %v525 = vsel %vm224, %v517, 0
    %527 = vmatpush.msra.mxu0 0.0
    %528 = vmatpush.msra.mxu0 0.0
    %529 = vmatpush.msra.mxu0 0.0
    %530 = vmatpush.msra.mxu0 0.0
    %531 = vmatpush.msra.mxu0 0.0
    %532 = vmatpush.msra.mxu0 0.0
    %533 = vmatpush.msra.mxu0 0.0
    %534 = vmatpush.msra.mxu0 0.0
    %535 = vmatpush.msra.mxu0 0.0
    %536 = vmatpush.msra.mxu0 0.0
    %537 = vmatpush.msra.mxu0 0.0
    %538 = vmatpush.msra.mxu0 0.0
    %539 = vmatpush.msra.mxu0 0.0
    %540 = vmatpush.msra.mxu0 0.0
    %541 = vmatpush.msra.mxu0 %v519
    %542 = vmatpush.msra.mxu0 %v518
    %543 = vmatmul.f32.gmra.mxu0 %v525
    %v544 = vpop.f32.mrf.mxu0
    %v545 = vadd.f32 %v522, %v544
    %546 = vdwg.mxu0
    %v547 = vmax.f32 %v545, 0.0
    %v548 = vld [vmem:[%s11] sm:$0xff]
    %v549 = vld [vmem:[%s11 + $0x8] sm:$0xff]
    %v550 = vld [vmem:[%s11 + $0x10] sm:$0xff]
    %v551 = vld [vmem:[%s11 + $0x18] sm:$0xff]
    %v552 = vld [vmem:[%s12] sm:$0x1]
    %v554 = vperm.slane %v552, 0
    %vm556 = vcmask 261120
    %v558 = vsel %vm556, %v547, 0
    %560 = vmatpush.msra.mxu0 0.0
    %561 = vmatpush.msra.mxu0 0.0
    %562 = vmatpush.msra.mxu0 0.0
    %563 = vmatpush.msra.mxu0 0.0
    %564 = vmatpush.msra.mxu0 0.0
    %565 = vmatpush.msra.mxu0 0.0
    %566 = vmatpush.msra.mxu0 0.0
    %567 = vmatpush.msra.mxu0 0.0
    %568 = vmatpush.msra.mxu0 0.0
    %569 = vmatpush.msra.mxu0 0.0
    %570 = vmatpush.msra.mxu0 0.0
    %571 = vmatpush.msra.mxu0 0.0
    %572 = vmatpush.msra.mxu0 %v551
    %573 = vmatpush.msra.mxu0 %v550
    %574 = vmatpush.msra.mxu0 %v549
    %575 = vmatpush.msra.mxu0 %v548
    %576 = vmatmul.f32.gmra.mxu0 %v558
    %v577 = vpop.f32.mrf.mxu0
    %v578 = vadd.f32 %v554, %v577
    %579 = vdwg.mxu0
    %v580 = vmax.f32 %v578, 0.0
    %v581 = vld [vmem:[%s13] sm:$0xff]
    %v582 = vld [vmem:[%s13 + $0x8] sm:$0xff]
    %v583 = vld [vmem:[%s13 + $0x10] sm:$0xff]
    %v584 = vld [vmem:[%s13 + $0x18] sm:$0xff]
    %v585 = vld [vmem:[%s14] sm:$0x1]
    %v587 = vperm.slane %v585, 0
    %v590 = vsel %vm556, %v580, 0
    %592 = vmatpush.msra.mxu0 0.0
    %593 = vmatpush.msra.mxu0 0.0
    %594 = vmatpush.msra.mxu0 0.0
    %595 = vmatpush.msra.mxu0 0.0
    %596 = vmatpush.msra.mxu0 0.0
    %597 = vmatpush.msra.mxu0 0.0
    %598 = vmatpush.msra.mxu0 0.0
    %599 = vmatpush.msra.mxu0 0.0
    %600 = vmatpush.msra.mxu0 0.0
    %601 = vmatpush.msra.mxu0 0.0
    %602 = vmatpush.msra.mxu0 0.0
    %603 = vmatpush.msra.mxu0 0.0
    %604 = vmatpush.msra.mxu0 %v584
    %605 = vmatpush.msra.mxu0 %v583
    %606 = vmatpush.msra.mxu0 %v582
    %607 = vmatpush.msra.mxu0 %v581
    %608 = vmatmul.f32.gmra.mxu0 %v590
    %v609 = vpop.f32.mrf.mxu0
    %v610 = vadd.f32 %v587, %v609
    %611 = vdwg.mxu0
    %v612 = vtanh.pop %v610
    %vm613 = vcmask 25600
    %614 = vst.msk [vmem:[#allocation13] sm:$0x3] %vm613, %v612
    // Predicated region
    $region86: #{tpu_custom_call.1} parent=1 // pred_check
      _
    $region87: #{tpu_custom_call.1} parent=1 // pred_check_branch
      %616 = sbr.rel (0) target = $region89
    $region88: #{tpu_custom_call.1} parent=1 // pred_region
      %618 = vsyncadd [#allocation4], 0
      %s620 = sshll.u32 [#allocation13], 4
      %s621 = int_to_ptr.vmem [resolvable:$true] %s620
      %s622 = sshll.u32 %s15, 4
      %s623 = int_to_ptr.hbm [resolvable:$true] %s622
      %625 = dma.vmem_to_hbm [thread:$0]  %s621, 32, %s623, [#allocation4]
    $region89: #{tpu_custom_call.1} parent=1 // pred_fallthru
      _
    // Predicated region
    $region90: #{tpu_custom_call.1} parent=1 // pred_check
      _
    $region91: #{tpu_custom_call.1} parent=1 // pred_check_branch
      %627 = sbr.rel (0) target = $region93
    $region92: #{tpu_custom_call.1} parent=1 // pred_region
      %629 = dma.done [#allocation4], 32
    $region93: #{tpu_custom_call.1} parent=1 // pred_fallthru
      _
    %630 = vsyncpa [#allocation3], 1
    %631 = vsyncpa [#allocation6], 1
    %632 = vsyncpa [#allocation9], 1
    %633 = vsyncpa [#allocation12], 1
    %634 = vsyncpa [#allocation4], 1

</llo_original>
